<compile_context>
chip_gen: v7x
topology: tpu7x:2x2x1
jax: 0.10.0
libtpu: 0.0.40
codegen_flags: <defaults>
</compile_context>

<pallas_src>
import jax
import jax.numpy as jnp
from jax import lax
from jax.experimental import pallas as pl
from jax.experimental.pallas import tpu as pltpu

# Deterministic "parameters" of MixedLoss (loss_vec = (MSE, L1)).
# TODO(synk): the weights and the (MSE, L1) composition are baked in at trace
# time (the PyTorch module keeps them as plain Python floats too, not
# learnable), so this matches the spec but is not generic over loss_vec.
WEIGHT_PARAMETERS = (0.7, 0.3)

LANE = 128                          # lane width (last dim of every block)
SMALL_INPUT_BYTES = 512 * 1024      # below this: pure-JAX fast path


def _cdiv(a: int, b: int) -> int:
    return (a + b - 1) // b


def _detect_tpu_generation() -> str:
    try:
        kind = jax.devices()[0].device_kind.lower()
    except Exception:
        return "unknown"
    if "7x" in kind or "v7" in kind:
        return "v7x"
    if "v6" in kind:
        return "v6e"
    if "v5" in kind:
        return "v5"
    return "unknown"


def _tpu_config():
    """Per-generation (partitions, block bytes/input, vmem limit, lead-axis sem)."""
    gen = _detect_tpu_generation()
    arb = pltpu.ARBITRARY
    if gen == "v7x":
        core_parallel = getattr(pltpu, "CORE_PARALLEL", None)
        if core_parallel is not None:
            # 2 TCs/chip: actually shard the stream across both cores.
            # Only 64 MiB VMEM -> keep blocks at 4 MiB/input (16 MiB pipelined).
            return dict(partitions=2, block_bytes=4 << 20,
                        vmem_limit=48 << 20, lead_sem=core_parallel)
        return dict(partitions=1, block_bytes=4 << 20,
                    vmem_limit=48 << 20, lead_sem=arb)
    if gen == "v6e":
        # 1 TC, 128 MiB VMEM, ~1.4 TB/s: grow blocks to amortize the ~0.35 us
        # per-step pipeline overhead.
        return dict(partitions=1, block_bytes=8 << 20,
                    vmem_limit=96 << 20, lead_sem=arb)
    if gen == "v5":
        # ~820 GB/s: 2 MiB/input is already ~5 us/step; the 16 MiB scoped
        # VMEM default still needs raising.
        return dict(partitions=1, block_bytes=2 << 20,
                    vmem_limit=32 << 20, lead_sem=arb)
    # Unknown chip: conservative settings.
    return dict(partitions=1, block_bytes=2 << 20,
                vmem_limit=32 << 20, lead_sem=arb)


def _pick_tm(m_rows: int, itemsize: int, block_bytes: int) -> int:
    """Rows per block: ~block_bytes per input per step, multiple of 8."""
    tm = block_bytes // (LANE * itemsize)
    cap = (m_rows // 8) * 8 if m_rows >= 8 else 8
    tm = max(8, min((tm // 8) * 8, cap))
    return int(tm)


def _make_kernel(w_mse: float, w_l1: float, tm: int, m_valid: int,
                 blocks_per_part: int):
    n_sub = tm // 8                     # number of (8,128) vregs per block
    unroll = min(8, n_sub)

    def kernel(x_ref, y_ref, o_ref):
        p = pl.program_id(0)            # partition (core-parallel on v7x)
        j = pl.program_id(1)            # streaming step ('arbitrary', reduction)

        @pl.when(j == 0)
        def _init():
            o_ref[...] = jnp.zeros_like(o_ref)

        block = p * blocks_per_part + j     # logical (unclamped) block id
        row0 = block * tm                   # first row covered by this step

        def contrib(i):
            idx = pl.multiple_of(i * 8, 8)
            xs = x_ref[pl.ds(idx, 8), :].astype(jnp.float32)
            ys = y_ref[pl.ds(idx, 8), :].astype(jnp.float32)
            a = jnp.abs(xs - ys)
            # |d| * (w_mse*|d| + w_l1)  ==  w_mse*d^2 + w_l1*|d|
            return a * (w_mse * a + w_l1)

        full = row0 + tm <= m_valid     # block entirely inside valid rows?

        @pl.when(full)
        def _hot():                     # no masking on the hot path
            def body(i, acc):
                return acc + contrib(i)
            acc = lax.fori_loop(0, n_sub, body,
                                jnp.zeros((8, LANE), jnp.float32),
                                unroll=unroll)
            o_ref[...] += acc[None]

        @pl.when(jnp.logical_not(full))
        def _tail():                    # edge block or clamped duplicate block
            def body(i, acc):
                rows = (row0 + i * 8
                        + lax.broadcasted_iota(jnp.int32, (8, 1), 0))
                # Select (NOT multiply-by-mask): rows beyond the DMA'd region
                # hold stale VMEM garbage (possibly NaN/Inf) and must not
                # propagate into the accumulator.
                return acc + jnp.where(rows < m_valid, contrib(i), 0.0)
            acc = lax.fori_loop(0, n_sub, body,
                                jnp.zeros((8, LANE), jnp.float32),
                                unroll=unroll)
            o_ref[...] += acc[None]

    return kernel


def _mixed_loss_sum_jax(x, y, w_mse, w_l1):
    """Fused pure-JAX SUM of the mixed loss (caller divides by n)."""
    a = jnp.abs(x.astype(jnp.float32) - y.astype(jnp.float32))
    return jnp.sum(a * (w_mse * a + w_l1))


def mixed_loss(x, y, weight_parameters=WEIGHT_PARAMETERS, *, force_pallas=False):
    """Pallas implementation of MixedLoss((MSELoss, L1Loss), weights)(x, y)."""
    assert x.shape == y.shape, "x and y must have the same shape"
    n = int(x.size)
    if n == 0:
        return jnp.float32(0.0)
    w_mse, w_l1 = float(weight_parameters[0]), float(weight_parameters[1])

    # Small-input fast path: the fixed pallas_call launch dominates below a
    # few hundred KiB; XLA's fused reduction is strictly faster there.
    # Inputs smaller than one (8,128) row-block always take this path.
    small = n * x.dtype.itemsize < SMALL_INPUT_BYTES
    if (small and not force_pallas) or n < 8 * LANE:
        return _mixed_loss_sum_jax(x, y, w_mse, w_l1) / n

    fx = x.reshape(-1)
    fy = y.reshape(-1)

    # No O(n) pad copy: when numel % 128 == 0 (typical NCHW tensors) the
    # (m, 128) view below is a free reshape.  Otherwise only the <128-element
    # remainder is evaluated in pure JAX and the 128-aligned prefix is handed
    # to the kernel — no padding of both full tensors to a longer buffer.
    rem = n % LANE
    n_main = n - rem
    tail_sum = jnp.float32(0.0)
    if rem:
        tail_sum = _mixed_loss_sum_jax(lax.slice(fx, (n_main,), (n,)),
                                       lax.slice(fy, (n_main,), (n,)),
                                       w_mse, w_l1)
        fx = lax.slice(fx, (0,), (n_main,))
        fy = lax.slice(fy, (0,), (n_main,))

    m = n_main // LANE                  # valid (data-bearing) rows
    X = fx.reshape(m, LANE)             # source dtype stays in HBM; widen in-kernel
    Y = fy.reshape(m, LANE)

    cfg = _tpu_config()
    tm = _pick_tm(m, X.dtype.itemsize, cfg["block_bytes"])
    nblocks = _cdiv(m, tm)
    p_parts = min(int(cfg["partitions"]), nblocks)   # never an empty partition
    bpp = _cdiv(nblocks, p_parts)       # streaming steps per partition
    last_block = nblocks - 1

    def in_map(p, j):
        b = p * bpp + j
        # Clamp so the DMA never goes fully out of bounds; the kernel masks
        # the (logically out-of-range) duplicate block to zero.
        return (jnp.minimum(b, last_block), 0)

    kernel = _make_kernel(w_mse, w_l1, tm, m, bpp)
    lead_sem = cfg["lead_sem"] if p_parts > 1 else pltpu.ARBITRARY

    parts = pl.pallas_call(
        kernel,
        out_shape=jax.ShapeDtypeStruct((p_parts, 8, LANE), jnp.float32),
        grid_spec=pltpu.PrefetchScalarGridSpec(
            num_scalar_prefetch=0,
            grid=(p_parts, bpp),
            # NOTE: pipeline_mode=pl.Buffered(3) on the two inputs is a
            # possible further sweep (per-step compute is ~0); left at the
            # default double buffering here.
            in_specs=[
                pl.BlockSpec((tm, LANE), in_map),
                pl.BlockSpec((tm, LANE), in_map),
            ],
            # Per-partition resident accumulator block (same block for all j).
            out_specs=pl.BlockSpec((1, 8, LANE), lambda p, j: (p, 0, 0)),
        ),
        compiler_params=pltpu.CompilerParams(
            dimension_semantics=(lead_sem, pltpu.ARBITRARY),
            vmem_limit_bytes=int(cfg["vmem_limit"]),
        ),
    )(X, Y)

    # One tiny cross-lane/sublane reduce + mean normalization.
    # NOTE: cross-block accumulation is plain sequential f32; for extremely
    # large tensors this can drift slightly vs. an XLA tree reduction.
    return (jnp.sum(parts) + tail_sum) / n


def mixed_loss_ref(x, y, weight_parameters=WEIGHT_PARAMETERS):
    """Pure-JAX reference mirroring F.mse_loss / F.l1_loss (mean reduction)."""
    xf = x.astype(jnp.float32)
    yf = y.astype(jnp.float32)
    mse = jnp.mean((xf - yf) ** 2)
    l1 = jnp.mean(jnp.abs(xf - yf))
    return weight_parameters[0] * mse + weight_parameters[1] * l1


if __name__ == "__main__":
    key = jax.random.PRNGKey(0)
    kx, ky = jax.random.split(key)
    # NCHW inputs, small shapes: batch=2, channels=4, spatial=16x16
    x = jax.random.normal(kx, (2, 4, 16, 16), dtype=jnp.float32)
    y = jax.random.normal(ky, (2, 4, 16, 16), dtype=jnp.float32)

    ref = mixed_loss_ref(x, y)

    # 1) Public entry point (tiny input -> fused pure-JAX fast path).
    out_fast = jax.block_until_ready(mixed_loss(x, y))
    assert jnp.allclose(out_fast, ref, rtol=1e-5, atol=1e-5), (out_fast, ref)

    # 2) Force the Pallas kernel path on the same small input.
    out_kernel = jax.block_until_ready(mixed_loss(x, y, force_pallas=True))
    assert jnp.allclose(out_kernel, ref, rtol=1e-5, atol=1e-5), (out_kernel, ref)

    # 3) Exercise the numel % 128 != 0 path (in-kernel edge-block masking plus
    #    the pure-JAX <128-element remainder) on another small NCHW shape.
    kx2, ky2 = jax.random.split(jax.random.PRNGKey(1))
    x2 = jax.random.normal(kx2, (2, 4, 17, 17), dtype=jnp.float32)
    y2 = jax.random.normal(ky2, (2, 4, 17, 17), dtype=jnp.float32)
    out2 = jax.block_until_ready(mixed_loss(x2, y2, force_pallas=True))
    ref2 = mixed_loss_ref(x2, y2)
    assert jnp.allclose(out2, ref2, rtol=1e-5, atol=1e-5), (out2, ref2)

    print("KERNEL_OK")
</pallas_src>

<mosaic_0001>
module attributes {stable_mosaic.version = 11 : i64} {
  func.func @kernel(%arg0: i32, %arg1: i32, %arg2: memref<16x128xf32, #tpu.memory_space<vmem>>, %arg3: memref<16x128xf32, #tpu.memory_space<vmem>>, %arg4: memref<1x8x128xf32, #tpu.memory_space<vmem>>) attributes {dimension_semantics = [#tpu.dimension_semantics<arbitrary>, #tpu.dimension_semantics<arbitrary>], iteration_bounds = array<i64: 1, 1>, scalar_prefetch = 0 : i64, scratch_operands = 0 : i64, tpu.core_type = #tpu.core_type<tc>, window_params = [{transform_indices = @transform_0, window_bounds = array<i64: 16, 128>}, {transform_indices = @transform_1, window_bounds = array<i64: 16, 128>}, {transform_indices = @transform_2, window_bounds = array<i64: 1, 8, 128>}]} {
    %c0_i32 = arith.constant 0 : i32
    %0 = arith.cmpi eq, %arg1, %c0_i32 : i32
    %1 = arith.extui %0 : i1 to i32
    %c0_i32_0 = arith.constant 0 : i32
    %2 = arith.cmpi ne, %1, %c0_i32_0 : i32
    scf.if %2 {
      %cst = arith.constant 0.000000e+00 : f32
      %13 = vector.broadcast %cst : f32 to vector<1x8x128xf32>
      %c0 = arith.constant 0 : index
      %c0_5 = arith.constant 0 : index
      %c0_6 = arith.constant 0 : index
      %14 = vector.load %arg4[%c0, %c0_5, %c0_6] : memref<1x8x128xf32, #tpu.memory_space<vmem>>, vector<1x8x128xf32>
      tpu.vector_store %arg4[%c0, %c0_5, %c0_6], %13 {strides = array<i32>} : memref<1x8x128xf32, #tpu.memory_space<vmem>>, vector<1x8x128xf32>,
    } else {
    }
    %c1_i32 = arith.constant 1 : i32
    %3 = arith.muli %arg0, %c1_i32 : i32
    %4 = arith.addi %3, %arg1 : i32
    %c16_i32 = arith.constant 16 : i32
    %5 = arith.muli %4, %c16_i32 : i32
    %c16_i32_1 = arith.constant 16 : i32
    %6 = arith.addi %5, %c16_i32_1 : i32
    %c16_i32_2 = arith.constant 16 : i32
    %7 = arith.cmpi sle, %6, %c16_i32_2 : i32
    %8 = arith.extui %7 : i1 to i32
    %c0_i32_3 = arith.constant 0 : i32
    %9 = arith.cmpi ne, %8, %c0_i32_3 : i32
    scf.if %9 {
      %cst = arith.constant 0.000000e+00 : f32
      %13 = vector.broadcast %cst : f32 to vector<8x128xf32>
      %c0_i32_5 = arith.constant 0 : i32
      %c8_i32 = arith.constant 8 : i32
      %14 = arith.muli %c0_i32_5, %c8_i32 : i32
      %15 = tpu.assume_multiple %14, 8 : i32
      %16 = arith.index_cast %15 : i32 to index
      %c0 = arith.constant 0 : index
      %17 = vector.load %arg2[%16, %c0] : memref<16x128xf32, #tpu.memory_space<vmem>>, vector<8x128xf32>
      %18 = arith.index_cast %15 : i32 to index
      %c0_6 = arith.constant 0 : index
      %19 = vector.load %arg3[%18, %c0_6] : memref<16x128xf32, #tpu.memory_space<vmem>>, vector<8x128xf32>
      %20 = arith.subf %17, %19 : vector<8x128xf32>
      %21 = math.absf %20 : vector<8x128xf32>
      %cst_7 = arith.constant 0.699999988 : f32
      %22 = vector.broadcast %cst_7 : f32 to vector<8x128xf32>
      %23 = arith.mulf %22, %21 : vector<8x128xf32>
      %cst_8 = arith.constant 3.000000e-01 : f32
      %24 = vector.broadcast %cst_8 : f32 to vector<8x128xf32>
      %25 = arith.addf %23, %24 : vector<8x128xf32>
      %26 = arith.mulf %21, %25 : vector<8x128xf32>
      %27 = arith.addf %13, %26 : vector<8x128xf32>
      %c1_i32_9 = arith.constant 1 : i32
      %c8_i32_10 = arith.constant 8 : i32
      %28 = arith.muli %c1_i32_9, %c8_i32_10 : i32
      %29 = tpu.assume_multiple %28, 8 : i32
      %30 = arith.index_cast %29 : i32 to index
      %c0_11 = arith.constant 0 : index
      %31 = vector.load %arg2[%30, %c0_11] : memref<16x128xf32, #tpu.memory_space<vmem>>, vector<8x128xf32>
      %32 = arith.index_cast %29 : i32 to index
      %c0_12 = arith.constant 0 : index
      %33 = vector.load %arg3[%32, %c0_12] : memref<16x128xf32, #tpu.memory_space<vmem>>, vector<8x128xf32>
      %34 = arith.subf %31, %33 : vector<8x128xf32>
      %35 = math.absf %34 : vector<8x128xf32>
      %cst_13 = arith.constant 0.699999988 : f32
      %36 = vector.broadcast %cst_13 : f32 to vector<8x128xf32>
      %37 = arith.mulf %36, %35 : vector<8x128xf32>
      %cst_14 = arith.constant 3.000000e-01 : f32
      %38 = vector.broadcast %cst_14 : f32 to vector<8x128xf32>
      %39 = arith.addf %37, %38 : vector<8x128xf32>
      %40 = arith.mulf %35, %39 : vector<8x128xf32>
      %41 = arith.addf %27, %40 : vector<8x128xf32>
      %c2_i32 = arith.constant 2 : i32
      %c0_15 = arith.constant 0 : index
      %c0_16 = arith.constant 0 : index
      %c0_17 = arith.constant 0 : index
      %42 = vector.load %arg4[%c0_15, %c0_16, %c0_17] : memref<1x8x128xf32, #tpu.memory_space<vmem>>, vector<1x8x128xf32>
      %43 = vector.shape_cast %41 : vector<8x128xf32> to vector<1x8x128xf32>
      %44 = arith.addf %42, %43 : vector<1x8x128xf32>
      %c0_18 = arith.constant 0 : index
      %c0_19 = arith.constant 0 : index
      %c0_20 = arith.constant 0 : index
      %45 = vector.load %arg4[%c0_18, %c0_19, %c0_20] : memref<1x8x128xf32, #tpu.memory_space<vmem>>, vector<1x8x128xf32>
      tpu.vector_store %arg4[%c0_18, %c0_19, %c0_20], %44 {strides = array<i32>} : memref<1x8x128xf32, #tpu.memory_space<vmem>>, vector<1x8x128xf32>,
    } else {
    }
    %true = arith.constant true
    %10 = arith.xori %7, %true : i1
    %11 = arith.extui %10 : i1 to i32
    %c0_i32_4 = arith.constant 0 : i32
    %12 = arith.cmpi ne, %11, %c0_i32_4 : i32
    scf.if %12 {
      %cst = arith.constant 0.000000e+00 : f32
      %13 = vector.broadcast %cst : f32 to vector<8x128xf32>
      %c0_i32_5 = arith.constant 0 : i32
      %c8_i32 = arith.constant 8 : i32
      %14 = arith.muli %c0_i32_5, %c8_i32 : i32
      %15 = arith.addi %5, %14 : i32
      %16 = tpu.iota {dimensions = array<i32: 0>} : vector<8x1xi32>
      %17 = vector.broadcast %15 : i32 to vector<8x1xi32>
      %18 = arith.addi %17, %16 : vector<8x1xi32>
      %c16_i32_6 = arith.constant 16 : i32
      %19 = vector.broadcast %c16_i32_6 : i32 to vector<8x1xi32>
      %20 = arith.cmpi slt, %18, %19 : vector<8x1xi32>
      %c8_i32_7 = arith.constant 8 : i32
      %21 = arith.muli %c0_i32_5, %c8_i32_7 : i32
      %22 = tpu.assume_multiple %21, 8 : i32
      %23 = arith.index_cast %22 : i32 to index
      %c0 = arith.constant 0 : index
      %24 = vector.load %arg2[%23, %c0] : memref<16x128xf32, #tpu.memory_space<vmem>>, vector<8x128xf32>
      %25 = arith.index_cast %22 : i32 to index
      %c0_8 = arith.constant 0 : index
      %26 = vector.load %arg3[%25, %c0_8] : memref<16x128xf32, #tpu.memory_space<vmem>>, vector<8x128xf32>
      %27 = arith.subf %24, %26 : vector<8x128xf32>
      %28 = math.absf %27 : vector<8x128xf32>
      %cst_9 = arith.constant 0.699999988 : f32
      %29 = vector.broadcast %cst_9 : f32 to vector<8x128xf32>
      %30 = arith.mulf %29, %28 : vector<8x128xf32>
      %cst_10 = arith.constant 3.000000e-01 : f32
      %31 = vector.broadcast %cst_10 : f32 to vector<8x128xf32>
      %32 = arith.addf %30, %31 : vector<8x128xf32>
      %33 = arith.mulf %28, %32 : vector<8x128xf32>
      %cst_11 = arith.constant 0.000000e+00 : f32
      %34 = vector.shape_cast %20 : vector<8x1xi1> to vector<8x1xi1>
      %35 = vector.broadcast %34 : vector<8x1xi1> to vector<8x128xi1>
      %36 = vector.broadcast %cst_11 : f32 to vector<8x128xf32>
      %37 = arith.select %35, %33, %36 : vector<8x128xi1>, vector<8x128xf32>
      %38 = arith.addf %13, %37 : vector<8x128xf32>
      %c1_i32_12 = arith.constant 1 : i32
      %c8_i32_13 = arith.constant 8 : i32
      %39 = arith.muli %c1_i32_12, %c8_i32_13 : i32
      %40 = arith.addi %5, %39 : i32
      %41 = tpu.iota {dimensions = array<i32: 0>} : vector<8x1xi32>
      %42 = vector.broadcast %40 : i32 to vector<8x1xi32>
      %43 = arith.addi %42, %41 : vector<8x1xi32>
      %c16_i32_14 = arith.constant 16 : i32
      %44 = vector.broadcast %c16_i32_14 : i32 to vector<8x1xi32>
      %45 = arith.cmpi slt, %43, %44 : vector<8x1xi32>
      %c8_i32_15 = arith.constant 8 : i32
      %46 = arith.muli %c1_i32_12, %c8_i32_15 : i32
      %47 = tpu.assume_multiple %46, 8 : i32
      %48 = arith.index_cast %47 : i32 to index
      %c0_16 = arith.constant 0 : index
      %49 = vector.load %arg2[%48, %c0_16] : memref<16x128xf32, #tpu.memory_space<vmem>>, vector<8x128xf32>
      %50 = arith.index_cast %47 : i32 to index
      %c0_17 = arith.constant 0 : index
      %51 = vector.load %arg3[%50, %c0_17] : memref<16x128xf32, #tpu.memory_space<vmem>>, vector<8x128xf32>
      %52 = arith.subf %49, %51 : vector<8x128xf32>
      %53 = math.absf %52 : vector<8x128xf32>
      %cst_18 = arith.constant 0.699999988 : f32
      %54 = vector.broadcast %cst_18 : f32 to vector<8x128xf32>
      %55 = arith.mulf %54, %53 : vector<8x128xf32>
      %cst_19 = arith.constant 3.000000e-01 : f32
      %56 = vector.broadcast %cst_19 : f32 to vector<8x128xf32>
      %57 = arith.addf %55, %56 : vector<8x128xf32>
      %58 = arith.mulf %53, %57 : vector<8x128xf32>
      %cst_20 = arith.constant 0.000000e+00 : f32
      %59 = vector.shape_cast %45 : vector<8x1xi1> to vector<8x1xi1>
      %60 = vector.broadcast %59 : vector<8x1xi1> to vector<8x128xi1>
      %61 = vector.broadcast %cst_20 : f32 to vector<8x128xf32>
      %62 = arith.select %60, %58, %61 : vector<8x128xi1>, vector<8x128xf32>
      %63 = arith.addf %38, %62 : vector<8x128xf32>
      %c2_i32 = arith.constant 2 : i32
      %c0_21 = arith.constant 0 : index
      %c0_22 = arith.constant 0 : index
      %c0_23 = arith.constant 0 : index
      %64 = vector.load %arg4[%c0_21, %c0_22, %c0_23] : memref<1x8x128xf32, #tpu.memory_space<vmem>>, vector<1x8x128xf32>
      %65 = vector.shape_cast %63 : vector<8x128xf32> to vector<1x8x128xf32>
      %66 = arith.addf %64, %65 : vector<1x8x128xf32>
      %c0_24 = arith.constant 0 : index
      %c0_25 = arith.constant 0 : index
      %c0_26 = arith.constant 0 : index
      %67 = vector.load %arg4[%c0_24, %c0_25, %c0_26] : memref<1x8x128xf32, #tpu.memory_space<vmem>>, vector<1x8x128xf32>
      tpu.vector_store %arg4[%c0_24, %c0_25, %c0_26], %66 {strides = array<i32>} : memref<1x8x128xf32, #tpu.memory_space<vmem>>, vector<1x8x128xf32>,
    } else {
    }
    return
  }
  func.func @transform_0(%arg0: i32, %arg1: i32) -> (i32, i32) {
    %c1_i32 = arith.constant 1 : i32
    %0 = arith.muli %arg0, %c1_i32 : i32
    %1 = arith.addi %0, %arg1 : i32
    %c0_i32 = arith.constant 0 : i32
    %2 = arith.minsi %1, %c0_i32 : i32
    %c0_i32_0 = arith.constant 0 : i32
    %c0_i32_1 = arith.constant 0 : i32
    return %2, %c0_i32_0 : i32, i32
  }
  func.func @transform_1(%arg0: i32, %arg1: i32) -> (i32, i32) {
    %c1_i32 = arith.constant 1 : i32
    %0 = arith.muli %arg0, %c1_i32 : i32
    %1 = arith.addi %0, %arg1 : i32
    %c0_i32 = arith.constant 0 : i32
    %2 = arith.minsi %1, %c0_i32 : i32
    %c0_i32_0 = arith.constant 0 : i32
    %c0_i32_1 = arith.constant 0 : i32
    return %2, %c0_i32_0 : i32, i32
  }
  func.func @transform_2(%arg0: i32, %arg1: i32) -> (i32, i32, i32) {
    %c0_i32 = arith.constant 0 : i32
    %c0_i32_0 = arith.constant 0 : i32
    %c0_i32_1 = arith.constant 0 : i32
    return %arg0, %c0_i32, %c0_i32_0 : i32, i32, i32
  }
}

</mosaic_0001>

<llo_original>
// kernel: tpu_custom_call.1
$region0: #{tpu_custom_call.1}
  #allocation0 [shape = 'u32[]', space=smem, size = 0x4, offset = 0x4, fixed_abs, tag = 'smem constant byte address 0x4 - core index']
  #allocation1 [shape = 'u32[144,128]{1,0:T(1,128)}', space=vmem, size = 0x12000, scoped, tag = 'internal scratch']
  %s0 = inlined_call_operand.hbm [shape: f32[16,128], index: 0, kind: input, shape index: {}]
  %s1 = inlined_call_operand.hbm [shape: f32[16,128], index: 1, kind: input, shape index: {}]
  %s2 = inlined_call_operand.hbm [shape: f32[1,8,128], index: 2, kind: output, shape index: {}]
  %s3 = sld [smem:[#allocation0]]
  $region38: #{tpu_custom_call.1} parent=0
    _
  %s5 = ssub.s32 1, %s3
  %s6 = scalar_select 0, %s5, %s3
  $region1: #{tpu_custom_call.1} parent=0
    #allocation2 [shape = 'u8[8192]{0}', space=vmem, size = 0x2000, scoped, tag = 'input window, operand 0, single buffered']
    #allocation3 [shape = 's32[1]{0}', space=sflag, size = 0x4, scoped, tag = 'scoped memory for tpu_custom_call.1']
    #allocation4 [shape = 's32[1]{0}', space=sflag, size = 0x4, scoped, tag = 'scoped memory for tpu_custom_call.1']
    #allocation5 [shape = 'u8[8192]{0}', space=vmem, size = 0x2000, scoped, tag = 'input window, operand 1, single buffered']
    #allocation6 [shape = 's32[1]{0}', space=sflag, size = 0x4, scoped, tag = 'scoped memory for tpu_custom_call.1']
    #allocation7 [shape = 'u8[4096]{0}', space=vmem, size = 0x1000, scoped, tag = 'output window, operand 0, single buffered']
    %7 = vsyncpa [#allocation3], 0
    %8 = vsyncpa [#allocation6], 0
    %9 = vsyncpa [#allocation4], 0
    // Predicated region
    $region2: #{tpu_custom_call.1} parent=1 // pred_check
      _
    $region3: #{tpu_custom_call.1} parent=1 // pred_check_branch
      %11 = sbr.rel (0) target = $region5
    $region4: #{tpu_custom_call.1} parent=1 // pred_region
      %s12 = sadd.s32 0, 0
      %p13 = scmp.lt.s32.totalorder %s12, 0
      %s14 = scalar_select %p13, %s12, 0
      %s15 = smul.u32 2, %s14
      %s17 = ssub.s32 256, 256
      %18 = vsyncadd [#allocation3], %s17
      %s19 = smul.addr %s15, 128
      %s20 = scalar_lea.hbm %s0, %s19
      %s21 = sshll.u32 [#allocation2], 4
      %s22 = int_to_ptr.vmem [resolvable:$true] %s21
      %27 = dma.hbm_to_vmem [thread:$0]  %s20, 256, %s22, [#allocation3], 128, 128, 8
    $region5: #{tpu_custom_call.1} parent=1 // pred_fallthru
      _
    // Predicated region
    $region6: #{tpu_custom_call.1} parent=1 // pred_check
      _
    $region7: #{tpu_custom_call.1} parent=1 // pred_check_branch
      %29 = sbr.rel (0) target = $region9
    $region8: #{tpu_custom_call.1} parent=1 // pred_region
      %s30 = sadd.s32 0, 0
      %p31 = scmp.lt.s32.totalorder %s30, 0
      %s32 = scalar_select %p31, %s30, 0
      %s33 = smul.u32 2, %s32
      %s35 = ssub.s32 256, 256
      %36 = vsyncadd [#allocation6], %s35
      %s37 = smul.addr %s33, 128
      %s38 = scalar_lea.hbm %s1, %s37
      %s39 = sshll.u32 [#allocation5], 4
      %s40 = int_to_ptr.vmem [resolvable:$true] %s39
      %45 = dma.hbm_to_vmem [thread:$0]  %s38, 256, %s40, [#allocation6], 128, 128, 8
    $region9: #{tpu_custom_call.1} parent=1 // pred_fallthru
      _
    // Predicated region
    $region10: #{tpu_custom_call.1} parent=1 // pred_check
      _
    $region11: #{tpu_custom_call.1} parent=1 // pred_check_branch
      %47 = sbr.rel (0) target = $region13
    $region12: #{tpu_custom_call.1} parent=1 // pred_region
      %48 = dma.done [#allocation3], 256
    $region13: #{tpu_custom_call.1} parent=1 // pred_fallthru
      _
    // Predicated region
    $region14: #{tpu_custom_call.1} parent=1 // pred_check
      _
    $region15: #{tpu_custom_call.1} parent=1 // pred_check_branch
      %50 = sbr.rel (0) target = $region17
    $region16: #{tpu_custom_call.1} parent=1 // pred_region
      %51 = dma.done [#allocation6], 256
    $region17: #{tpu_custom_call.1} parent=1 // pred_fallthru
      _
    %s52 = sadd.s32 0, 0
    %p53 = scmp.lt.s32.totalorder %s52, 0
    %s54 = scalar_select %p53, %s52, 0
    %s55 = smul.u32 2, %s54
    %s56 = sadd.s32 0, 0
    %p57 = scmp.lt.s32.totalorder %s56, 0
    %s58 = scalar_select %p57, %s56, 0
    %s59 = smul.u32 2, %s58
    %p60 = scmp.eq.s32.totalorder 0, 0
    // Predicated region
    $region18: #{tpu_custom_call.1} parent=1 // pred_check
      %p61 = pneg %p60
    $region19: #{tpu_custom_call.1} parent=1 // pred_check_branch
      %63 = sbr.rel (%p61) target = $region21
    $region20: #{tpu_custom_call.1} parent=1 // pred_region
      %64 = vst [vmem:[#allocation7] sm:$0xff] 0.0
    $region21: #{tpu_custom_call.1} parent=1 // pred_fallthru
      _
    %s65 = sadd.s32 0, 0
    %s66 = smul.u32 %s65, 16
    %s67 = sadd.s32 %s66, 16
    %p68 = scmp.le.s32.totalorder %s67, 16
    // Predicated region
    $region22: #{tpu_custom_call.1} parent=1 // pred_check
      %p69 = pneg %p68
    $region23: #{tpu_custom_call.1} parent=1 // pred_check_branch
      %71 = sbr.rel (%p69) target = $region25
    $region24: #{tpu_custom_call.1} parent=1 // pred_region
      %v72 = vld [vmem:[#allocation2] sm:$0xff]
      %v73 = vld [vmem:[#allocation5] sm:$0xff]
      %v74 = vsub.f32 %v72, %v73
      %v75 = vand.u32 2147483647, %v74
      %v76 = vmul.f32 %v75, 0.7
      %v77 = vadd.f32 %v76, 0.3
      %v78 = vmul.f32 %v75, %v77
      %v79 = vadd.f32 %v78, 0.0
      %s80 = scalar_lea.vmem [#allocation2], 8
      %v81 = vld [vmem:[%s80] sm:$0xff]
      %s82 = scalar_lea.vmem [#allocation5], 8
      %v83 = vld [vmem:[%s82] sm:$0xff]
      %v84 = vsub.f32 %v81, %v83
      %v85 = vand.u32 2147483647, %v84
      %v86 = vmul.f32 %v85, 0.7
      %v87 = vadd.f32 %v86, 0.3
      %v88 = vmul.f32 %v85, %v87
      %v89 = vadd.f32 %v79, %v88
      %v90 = vld [vmem:[#allocation7] sm:$0xff]
      %v91 = vadd.f32 %v90, %v89
      %92 = vst [vmem:[#allocation7] sm:$0xff] %v91
    $region25: #{tpu_custom_call.1} parent=1 // pred_fallthru
      _
    %p93 = scmp.gt.s32.totalorder %s67, 16
    // Predicated region
    $region26: #{tpu_custom_call.1} parent=1 // pred_check
      %p94 = pneg %p93
    $region27: #{tpu_custom_call.1} parent=1 // pred_check_branch
      %96 = sbr.rel (%p94) target = $region29
    $region28: #{tpu_custom_call.1} parent=1 // pred_region
      %v97 = vlaneseq
      %v98 = vshrl.u32 %v97, 7
      %v99 = vstv %s66
      %v100 = vadd.s32 %v99, %v98
      %vm101 = vcmp.lt.s32.totalorder %v100, 16
      %v102 = vld [vmem:[#allocation2] sm:$0xff]
      %v103 = vld [vmem:[#allocation5] sm:$0xff]
      %v104 = vsub.f32 %v102, %v103
      %v105 = vand.u32 2147483647, %v104
      %v106 = vmul.f32 %v105, 0.7
      %v107 = vadd.f32 %v106, 0.3
      %v108 = vmul.f32 %v105, %v107
      %v109 = vsel %vm101, 1, 0
      %vm110 = vcmp.eq.s32.totalorder %v109, 1
      %v111 = vsel %vm110, %v108, 0.0
      %v112 = vadd.f32 %v111, 0.0
      %s113 = sadd.s32 %s66, 8
      %v114 = vstv %s113
      %v115 = vadd.s32 %v114, %v98
      %vm116 = vcmp.lt.s32.totalorder %v115, 16
      %s117 = scalar_lea.vmem [#allocation2], 8
      %v118 = vld [vmem:[%s117] sm:$0xff]
      %s119 = scalar_lea.vmem [#allocation5], 8
      %v120 = vld [vmem:[%s119] sm:$0xff]
      %v121 = vsub.f32 %v118, %v120
      %v122 = vand.u32 2147483647, %v121
      %v123 = vmul.f32 %v122, 0.7
      %v124 = vadd.f32 %v123, 0.3
      %v125 = vmul.f32 %v122, %v124
      %v126 = vsel %vm116, 1, 0
      %vm127 = vcmp.eq.s32.totalorder %v126, 1
      %v128 = vsel %vm127, %v125, 0.0
      %v129 = vadd.f32 %v112, %v128
      %v130 = vld [vmem:[#allocation7] sm:$0xff]
      %v131 = vadd.f32 %v130, %v129
      %132 = vst [vmem:[#allocation7] sm:$0xff] %v131
    $region29: #{tpu_custom_call.1} parent=1 // pred_fallthru
      _
    // Predicated region
    $region30: #{tpu_custom_call.1} parent=1 // pred_check
      _
    $region31: #{tpu_custom_call.1} parent=1 // pred_check_branch
      %134 = sbr.rel (0) target = $region33
    $region32: #{tpu_custom_call.1} parent=1 // pred_region
      %s136 = ssub.s32 128, 128
      %137 = vsyncadd [#allocation4], %s136
      %s139 = sshll.u32 [#allocation7], 4
      %s140 = int_to_ptr.vmem [resolvable:$true] %s139
      %142 = dma.vmem_to_hbm [thread:$0]  %s140, 128, %s2, [#allocation4]
    $region33: #{tpu_custom_call.1} parent=1 // pred_fallthru
      _
    // Predicated region
    $region34: #{tpu_custom_call.1} parent=1 // pred_check
      _
    $region35: #{tpu_custom_call.1} parent=1 // pred_check_branch
      %144 = sbr.rel (0) target = $region37
    $region36: #{tpu_custom_call.1} parent=1 // pred_region
      %145 = dma.done [#allocation4], 128
    $region37: #{tpu_custom_call.1} parent=1 // pred_fallthru
      _
    %146 = vsyncpa [#allocation3], 1
    %147 = vsyncpa [#allocation6], 1
    %148 = vsyncpa [#allocation4], 1

</llo_original>
